<compile_context>
chip_gen: v7x
topology: tpu7x:2x2x1
jax: 0.10.0
libtpu: 0.0.40
codegen_flags: <defaults>
</compile_context>

<pallas_src>
import numpy as np
import jax
import jax.numpy as jnp
from jax.experimental import pallas as pl
from jax.experimental.pallas import tpu as pltpu


# ----------------------------------------------------------------------------
# Synthetic subgraph S (a cycle graph) and its eigenspaces  (host-side glue)
# ----------------------------------------------------------------------------
def cycle_adjacency(n: int) -> np.ndarray:
    a = np.zeros((n, n), dtype=np.float64)
    for i in range(n):
        a[i, (i + 1) % n] = 1.0
        a[(i + 1) % n, i] = 1.0
    return a


def eigenspaces(adj: np.ndarray, tol: float = 1e-6):
    """Group eigenvectors of `adj` by (approximately) equal eigenvalue."""
    evals, evecs = np.linalg.eigh(adj)
    groups, cur = [], [0]
    for i in range(1, len(evals)):
        if abs(evals[i] - evals[cur[-1]]) < tol:
            cur.append(i)
        else:
            groups.append(cur)
            cur = [i]
    groups.append(cur)
    return [evecs[:, g] for g in groups]  # list of (n, d_j) bases


# ----------------------------------------------------------------------------
# Pallas kernel: one fused lane-dense matmul + bias add per batch tile
# ----------------------------------------------------------------------------
def autobahn_kernel(x_ref, t_ref, bias_ref, o_ref):
    # x_ref:    (TB, n*Cin)        f32 tile; cast to bf16 in-kernel (hidden by DMA)
    # t_ref:    (n*Cin, n*Cout)    bf16 fused spectral operator (whole, const per step)
    # bias_ref: (1, n*Cout)        f32 flattened bias map (whole, const per step)
    # o_ref:    (TB, n*Cout)
    acc = jnp.dot(x_ref[...].astype(jnp.bfloat16), t_ref[...],
                  preferred_element_type=jnp.float32)
    o_ref[...] = (acc + bias_ref[...]).astype(o_ref.dtype)


def autobahn_pallas(x, P, W, bias_map, *, tile_b=256):
    """x: (N, n, Cin); P: (k, n, n); W: (k, Cin, Cout); bias_map: (n, Cout)."""
    N, n, c_in = x.shape
    k, _, c_out = W.shape
    n_cin, n_cout = n * c_in, n * c_out
    out_dtype = x.dtype

    # --- Fuse the eigenspace sum into a single (n*Cin, n*Cout) operator. ---
    # y[b, m, o] = sum_{j,n,i} P_j[m, n] * x[b, n, i] * W_j[i, o]
    #   => T[(n, i), (m, o)] = sum_j P_j[m, n] * W_j[i, o]
    # (one-time weight prep; bf16 for the MXU)
    T = jnp.einsum("kmn,kio->nimo", P, W).reshape(n_cin, n_cout).astype(jnp.bfloat16)
    bias2 = bias_map.reshape(1, n_cout).astype(jnp.float32)

    # --- Lane-dense 2-D presentation of x; no pad, no dtype pass in the wrapper. ---
    xf = x.reshape(N, n_cin)

    grid = (pl.cdiv(N, tile_b),)
    cost = pl.CostEstimate(
        flops=2 * N * n_cin * n_cout,
        transcendentals=0,
        bytes_accessed=(xf.size * xf.dtype.itemsize
                        + T.size * 2 + bias2.size * 4
                        + N * n_cout * np.dtype(out_dtype).itemsize),
    )

    out_flat = pl.pallas_call(
        autobahn_kernel,
        out_shape=jax.ShapeDtypeStruct((N, n_cout), out_dtype),
        grid_spec=pl.GridSpec(
            grid=grid,
            in_specs=[
                pl.BlockSpec((tile_b, n_cin), lambda i: (i, 0)),
                pl.BlockSpec((n_cin, n_cout), lambda i: (0, 0)),
                pl.BlockSpec((1, n_cout), lambda i: (0, 0)),
            ],
            out_specs=pl.BlockSpec((tile_b, n_cout), lambda i: (i, 0)),
        ),
        compiler_params=pltpu.CompilerParams(
            dimension_semantics=("parallel",),
        ),
        cost_estimate=cost,
    )(xf, T, bias2)

    return out_flat.reshape(N, n, c_out)


# ----------------------------------------------------------------------------
# Module-equivalent parameter init mirroring Autobahn.__init__
# ----------------------------------------------------------------------------
def init_autobahn_params(key, k, in_channels, out_channels):
    # torch.nn.init.xavier_uniform_ on a (k, Cin, Cout) tensor:
    #   fan_in = Cin * Cout, fan_out = k * Cout
    fan_in = in_channels * out_channels
    fan_out = k * out_channels
    bound = float(np.sqrt(6.0 / (fan_in + fan_out)))
    w = jax.random.uniform(
        key, (k, in_channels, out_channels), jnp.float32, -bound, bound
    )
    b = jnp.zeros((k, out_channels), jnp.float32)  # zeros_ as in reset_parameters
    return w, b


if __name__ == "__main__":
    # Subgraph S: cycle C_8  -> n = 8 nodes, k = 5 eigenspaces
    n_nodes = 8
    Vs = eigenspaces(cycle_adjacency(n_nodes))
    k = len(Vs)

    C_in, C_out = 32, 32
    N = 384       # NOT a multiple of tile_b -> exercises the pad-free ragged last block
    TILE_B = 256  # >= 2 parallel grid steps (v7x: both TCs); raise on v5e/v6e for big N

    key = jax.random.PRNGKey(0)
    k_w, k_b, k_x = jax.random.split(key, 3)
    W, b = init_autobahn_params(k_w, k, C_in, C_out)
    # Use a nonzero bias so the bias_map path is actually exercised by the check
    # (the module initializes b to zeros, but a trained model has b != 0).
    b = 0.1 * jax.random.normal(k_b, b.shape, jnp.float32)

    # Eigenspace projections and bias back-projection (glue).
    P = jnp.asarray(np.stack([V @ V.T for V in Vs]).astype(np.float32))        # (k, n, n)
    V1 = jnp.asarray(np.stack([V.sum(axis=1) for V in Vs]).astype(np.float32))  # (k, n)
    bias_map = jnp.einsum("kn,ko->no", V1, b)                                   # (n, Cout)

    # Input subgraph layer:  (N, n, C_in)
    x = jax.random.normal(k_x, (N, n_nodes, C_in), jnp.float32)

    y = autobahn_pallas(x, P, W, bias_map, tile_b=TILE_B)
    y = jax.block_until_ready(y)
    assert y.shape == (N, n_nodes, C_out)

    # 1) Exact f32 semantics reference (loose tol: bf16 MXU operands inside kernel).
    y_exact = jnp.einsum("kmn,bni,kio->bmo", P, x, W) + bias_map[None]
    np.testing.assert_allclose(
        np.asarray(y), np.asarray(y_exact), rtol=2e-2, atol=2e-2
    )

    # 2) bf16-emulated reference of exactly what the kernel computes (tight tol),
    #    guarding both the fused-operator math and the ragged-last-block masking.
    T_ref = (jnp.einsum("kmn,kio->nimo", P, W)
             .reshape(n_nodes * C_in, n_nodes * C_out).astype(jnp.bfloat16))
    x_bf = x.reshape(N, n_nodes * C_in).astype(jnp.bfloat16)
    y_emul = (jnp.dot(x_bf, T_ref, preferred_element_type=jnp.float32)
              + bias_map.reshape(1, -1)).reshape(N, n_nodes, C_out)
    np.testing.assert_allclose(
        np.asarray(y), np.asarray(y_emul), rtol=1e-4, atol=1e-4
    )

    print("KERNEL_OK")
</pallas_src>

<mosaic_0001>
module attributes {stable_mosaic.version = 11 : i64} {
  func.func @autobahn_kernel(%arg0: i32, %arg1: memref<256x256xf32, #tpu.memory_space<vmem>>, %arg2: memref<256x256xbf16, #tpu.memory_space<vmem>>, %arg3: memref<1x256xf32, #tpu.memory_space<vmem>>, %arg4: memref<256x256xf32, #tpu.memory_space<vmem>>) attributes {dimension_semantics = [#tpu.dimension_semantics<parallel>], iteration_bounds = array<i64: 2>, scalar_prefetch = 0 : i64, scratch_operands = 0 : i64, tpu.core_type = #tpu.core_type<tc>, window_params = [{transform_indices = @transform_0, window_bounds = array<i64: 256, 256>}, {pipeline_mode = #tpu.pipeline_mode<synchronous>, transform_indices = @transform_1, window_bounds = array<i64: 256, 256>}, {pipeline_mode = #tpu.pipeline_mode<synchronous>, transform_indices = @transform_2, window_bounds = array<i64: 1, 256>}, {transform_indices = @transform_3, window_bounds = array<i64: 256, 256>}]} {
    %c0 = arith.constant 0 : index
    %c0_0 = arith.constant 0 : index
    %0 = vector.load %arg1[%c0, %c0_0] : memref<256x256xf32, #tpu.memory_space<vmem>>, vector<256x256xf32>
    %1 = arith.truncf %0 : vector<256x256xf32> to vector<256x256xbf16>
    %c0_1 = arith.constant 0 : index
    %c0_2 = arith.constant 0 : index
    %2 = vector.load %arg2[%c0_1, %c0_2] : memref<256x256xbf16, #tpu.memory_space<vmem>>, vector<256x256xbf16>
    %cst = arith.constant dense<0.000000e+00> : vector<256x256xf32>
    %3 = tpu.matmul %1, %2, %cst {dimension_numbers = #tpu.dot_dimension_numbers<[1], [0], [0], [1], [0, 0, 1, 1], [], []>} : vector<256x256xbf16>, vector<256x256xbf16>, vector<256x256xf32> -> vector<256x256xf32>
    %c0_3 = arith.constant 0 : index
    %c0_4 = arith.constant 0 : index
    %4 = vector.load %arg3[%c0_3, %c0_4] : memref<1x256xf32, #tpu.memory_space<vmem>>, vector<1x256xf32>
    %5 = vector.broadcast %4 : vector<1x256xf32> to vector<256x256xf32>
    %6 = arith.addf %3, %5 : vector<256x256xf32>
    %c0_5 = arith.constant 0 : index
    %c0_6 = arith.constant 0 : index
    %7 = vector.load %arg4[%c0_5, %c0_6] : memref<256x256xf32, #tpu.memory_space<vmem>>, vector<256x256xf32>
    tpu.vector_store %arg4[%c0_5, %c0_6], %6 {strides = array<i32>} : memref<256x256xf32, #tpu.memory_space<vmem>>, vector<256x256xf32>,
    return
  }
  func.func @transform_0(%arg0: i32) -> (i32, i32) {
    %c0_i32 = arith.constant 0 : i32
    %c0_i32_0 = arith.constant 0 : i32
    return %arg0, %c0_i32 : i32, i32
  }
  func.func @transform_1(%arg0: i32) -> (i32, i32) {
    %c0_i32 = arith.constant 0 : i32
    %c0_i32_0 = arith.constant 0 : i32
    %c0_i32_1 = arith.constant 0 : i32
    return %c0_i32, %c0_i32_0 : i32, i32
  }
  func.func @transform_2(%arg0: i32) -> (i32, i32) {
    %c0_i32 = arith.constant 0 : i32
    %c0_i32_0 = arith.constant 0 : i32
    %c0_i32_1 = arith.constant 0 : i32
    return %c0_i32, %c0_i32_0 : i32, i32
  }
  func.func @transform_3(%arg0: i32) -> (i32, i32) {
    %c0_i32 = arith.constant 0 : i32
    %c0_i32_0 = arith.constant 0 : i32
    return %arg0, %c0_i32 : i32, i32
  }
}

</mosaic_0001>

<llo_original>
// kernel: tpu_custom_call.1
$region0: #{tpu_custom_call.1}
  #allocation0 [shape = 'u32[]', space=smem, size = 0x4, offset = 0x4, fixed_abs, tag = 'smem constant byte address 0x4 - core index']
  #allocation1 [shape = 'u32[144,128]{1,0:T(1,128)}', space=vmem, size = 0x12000, scoped, tag = 'internal scratch']
  %s0 = inlined_call_operand.hbm [shape: f32[384,256], index: 0, kind: input, shape index: {}]
  %s1 = inlined_call_operand.hbm [shape: bf16[256,256], index: 1, kind: input, shape index: {}]
  %s2 = inlined_call_operand.vmem [shape: f32[1,256], index: 2, kind: input, shape index: {}]
  %s3 = inlined_call_operand.hbm [shape: f32[384,256], index: 3, kind: output, shape index: {}]
  %s4 = sld [smem:[#allocation0]]
  $region53: #{tpu_custom_call.1} parent=0
    _
  %s6 = ssub.s32 1, %s4
  %s7 = scalar_select 0, %s6, %s4
  $region1: #{tpu_custom_call.1} parent=0
    #allocation2 [shape = 'u8[524288]{0}', space=vmem, size = 0x80000, scoped, tag = 'input window, operand 0']
    #allocation3 [shape = 's32[2]{0}', space=sflag, size = 0x8, scoped, tag = 'scoped memory for tpu_custom_call.1']
    #allocation4 [shape = 's32[2]{0}', space=sflag, size = 0x8, scoped, tag = 'scoped memory for tpu_custom_call.1']
    #allocation5 [shape = 'u8[131072]{0}', space=vmem, size = 0x20000, scoped, tag = 'input window, operand 1, single buffered']
    #allocation6 [shape = 's32[1]{0}', space=sflag, size = 0x4, scoped, tag = 'scoped memory for tpu_custom_call.1']
    #allocation7 [shape = 'u8[524288]{0}', space=vmem, size = 0x80000, scoped, tag = 'output window, operand 0']
    %8 = vsyncpa [#allocation3], 0
    %s9 = scalar_lea.sflag [#allocation3], 1
    %10 = vsyncpa %s9, 0
    %11 = vsyncpa [#allocation6], 0
    %12 = vsyncpa [#allocation4], 0
    %s13 = scalar_lea.sflag [#allocation4], 1
    %14 = vsyncpa %s13, 0
    loop: start=0, step=1, limit=4
    $region2: #{tpu_custom_call.1} parent=1 // loop_pre_header
      _
    $region3: #{tpu_custom_call.1} parent=1 // loop_header
      %s16 = sphi 0, %s20
      %p17 = scmp.ge.s32.totalorder %s16, 4
      %s26 = sphi 0, %s28
      %s29 = sphi 0, %s26
      %s30 = sphi 0, %s29
      %s46 = sphi 0, %s30
      %s50 = sphi 0, %s50
      %s52 = sphi 0, %s50
      %s53 = sphi 0, %s52
      %s67 = sphi 0, %s53
      %s71 = sphi 0, %s71
      %s73 = sphi 0, %s71
      %s74 = sphi 0, %s73
      %s88 = sphi 0, %s74
      %s94 = sphi 0, %s96
      %s97 = sphi 0, %s94
      %s98 = sphi 0, %s97
      %s114 = sphi 0, %s98
    $region4: #{tpu_custom_call.1} parent=1 // loop_header_branch
      %19 = sbr.rel (%p17) target = $region8
    $region5: #{tpu_custom_call.1} parent=1 // loop_body
      %s21 = ssub.s32 %s16, 1
      %s22 = ssub.s32 %s16, 2
      %s23 = sadd.s32 %s16, 1
      %s24 = ssub.s32 %s16, %s23
      %p25 = scmp.eq.s32.totalorder %s24, 0
      %s27 = sadd.s32 %s26, 1
      %s28 = scalar_select %p25, %s26, %s27
      %p31 = pneg %p25
      %p32 = scmp.eq.s32.totalorder %s16, 1
      %p33 = por %p31, %p32
      %p34 = scmp.ne.s32.totalorder %s26, %s29
      %p35 = scmp.eq.s32.totalorder %s16, 0
      %p36 = por %p34, %p35
      %p37 = scmp.ne.s32.totalorder %s26, %s29
      %p38 = scmp.eq.s32.totalorder %s21, 1
      %p39 = por %p37, %p38
      %p40 = scmp.ne.s32.totalorder %s29, %s30
      %p41 = scmp.eq.s32.totalorder %s21, 0
      %p42 = por %p40, %p41
      %p43 = scmp.ne.s32.totalorder %s29, %s30
      %p44 = scmp.eq.s32.totalorder %s22, 1
      %p45 = por %p43, %p44
      %p47 = scmp.ne.s32.totalorder %s30, %s46
      %p48 = scmp.eq.s32.totalorder %s22, 0
      %p49 = por %p47, %p48
      %s51 = sadd.s32 %s50, 1
      %p54 = scmp.eq.s32.totalorder %s16, 1
      %p55 = scmp.ne.s32.totalorder %s50, %s52
      %p56 = scmp.eq.s32.totalorder %s16, 0
      %p57 = por %p55, %p56
      %p58 = scmp.ne.s32.totalorder %s50, %s52
      %p59 = scmp.eq.s32.totalorder %s21, 1
      %p60 = por %p58, %p59
      %p61 = scmp.ne.s32.totalorder %s52, %s53
      %p62 = scmp.eq.s32.totalorder %s21, 0
      %p63 = por %p61, %p62
      %p64 = scmp.ne.s32.totalorder %s52, %s53
      %p65 = scmp.eq.s32.totalorder %s22, 1
      %p66 = por %p64, %p65
      %p68 = scmp.ne.s32.totalorder %s53, %s67
      %p69 = scmp.eq.s32.totalorder %s22, 0
      %p70 = por %p68, %p69
      %s72 = sadd.s32 %s71, 1
      %p75 = scmp.eq.s32.totalorder %s16, 1
      %p76 = scmp.ne.s32.totalorder %s71, %s73
      %p77 = scmp.eq.s32.totalorder %s16, 0
      %p78 = por %p76, %p77
      %p79 = scmp.ne.s32.totalorder %s71, %s73
      %p80 = scmp.eq.s32.totalorder %s21, 1
      %p81 = por %p79, %p80
      %p82 = scmp.ne.s32.totalorder %s73, %s74
      %p83 = scmp.eq.s32.totalorder %s21, 0
      %p84 = por %p82, %p83
      %p85 = scmp.ne.s32.totalorder %s73, %s74
      %p86 = scmp.eq.s32.totalorder %s22, 1
      %p87 = por %p85, %p86
      %p89 = scmp.ne.s32.totalorder %s74, %s88
      %p90 = scmp.eq.s32.totalorder %s22, 0
      %p91 = por %p89, %p90
      %s92 = ssub.s32 %s16, %s23
      %p93 = scmp.eq.s32.totalorder %s92, 0
      %s95 = sadd.s32 %s94, 1
      %s96 = scalar_select %p93, %s94, %s95
      %p99 = pneg %p93
      %p100 = scmp.eq.s32.totalorder %s16, 1
      %p101 = por %p99, %p100
      %p102 = scmp.ne.s32.totalorder %s94, %s97
      %p103 = scmp.eq.s32.totalorder %s16, 0
      %p104 = por %p102, %p103
      %p105 = scmp.ne.s32.totalorder %s94, %s97
      %p106 = scmp.eq.s32.totalorder %s21, 1
      %p107 = por %p105, %p106
      %p108 = scmp.ne.s32.totalorder %s97, %s98
      %p109 = scmp.eq.s32.totalorder %s21, 0
      %p110 = por %p108, %p109
      %p111 = scmp.ne.s32.totalorder %s97, %s98
      %p112 = scmp.eq.s32.totalorder %s22, 1
      %p113 = por %p111, %p112
      %p115 = scmp.ne.s32.totalorder %s98, %s114
      %p116 = scmp.eq.s32.totalorder %s22, 0
      %p117 = por %p115, %p116
      %p118 = scmp.le.s32.totalorder 1, %s16
      %p119 = scmp.lt.s32.totalorder %s16, 3
      %p120 = pnand %p118, %p119
      %p121 = pneg %p120
      // Predicated region
      $region9: #{tpu_custom_call.1} parent=5 // pred_check
        _
      $region10: #{tpu_custom_call.1} parent=5 // pred_check_branch
        %123 = sbr.rel (%p120) target = $region12
      $region11: #{tpu_custom_call.1} parent=5 // pred_region
        %s124 = ssub.s32 %s16, 1
        // Predicated region
        $region13: #{tpu_custom_call.1} parent=11 // pred_check
          %p125 = pneg %p63
        $region14: #{tpu_custom_call.1} parent=11 // pred_check_branch
          %127 = sbr.rel (%p125) target = $region16
        $region15: #{tpu_custom_call.1} parent=11 // pred_region
          %s129 = ssub.s32 4096, 4096
          %130 = vsyncadd [#allocation6], %s129
          %s131 = sshll.u32 [#allocation5], 4
          %s132 = int_to_ptr.vmem [resolvable:$true] %s131
          %137 = dma.hbm_to_vmem [thread:$0]  %s1, 4096, %s132, [#allocation6], 128, 128, 8
        $region16: #{tpu_custom_call.1} parent=11 // pred_fallthru
          _
        // Predicated region
        $region17: #{tpu_custom_call.1} parent=11 // pred_check
          %p138 = pneg %p84
        $region18: #{tpu_custom_call.1} parent=11 // pred_check_branch
          %140 = sbr.rel (%p138) target = $region20
        $region19: #{tpu_custom_call.1} parent=11 // pred_region
          _
        $region20: #{tpu_custom_call.1} parent=11 // pred_fallthru
          _
      $region12: #{tpu_custom_call.1} parent=5 // pred_fallthru
        _
      %p141 = scmp.lt.s32.totalorder %s16, 2
      // Predicated region
      $region21: #{tpu_custom_call.1} parent=5 // pred_check
        %p142 = pneg %p141
      $region22: #{tpu_custom_call.1} parent=5 // pred_check_branch
        %144 = sbr.rel (%p142) target = $region24
      $region23: #{tpu_custom_call.1} parent=5 // pred_region
        // Predicated region
        $region25: #{tpu_custom_call.1} parent=23 // pred_check
          %p145 = pneg %p36
        $region26: #{tpu_custom_call.1} parent=23 // pred_check_branch
          %147 = sbr.rel (%p145) target = $region28
        $region27: #{tpu_custom_call.1} parent=23 // pred_region
          %s148 = sand.u32 %s26, 1
          %s149 = scalar_lea.sflag [#allocation3], %s148
          %s150 = sand.u32 %s26, 1
          %s151 = smul.addr %s150, 512
          %s152 = scalar_lea.vmem [#allocation2], %s151
          %s153 = smul.u32 32, %s16
          %s154 = ssub.s32 48, %s153
          %p155 = scmp.lt.s32.totalorder %s154, 32
          %s156 = scalar_select %p155, %s154, 32
          %s157 = smul.u32 128, %s156
          %s158 = smul.u32 %s157, 2
          %s160 = ssub.s32 8192, %s158
          %161 = vsyncadd %s149, %s160
          %p162 = scmp.ne.s32.totalorder 0, %s158
          %s163 = smul.addr %s153, 2
          %s164 = smul.addr %s163, 128
          %s165 = scalar_lea.hbm %s0, %s164
          %s166 = smul.u32 16, %s156
          %s167 = sshll.u32 %s152, 4
          %s168 = int_to_ptr.vmem [resolvable:$true] %s167
          %s169 = sshll.u32 %s166, 4
          %173 = dma.hbm_to_vmem [thread:$0]  (%p162), %s165, %s169, %s168, %s149, 256, 256, 16
        $region28: #{tpu_custom_call.1} parent=23 // pred_fallthru
          _
      $region24: #{tpu_custom_call.1} parent=5 // pred_fallthru
        _
      %p174 = scmp.le.s32.totalorder 1, %s16
      %p175 = scmp.lt.s32.totalorder %s16, 3
      %p176 = pnand %p174, %p175
      %p177 = pneg %p176
      // Predicated region
      $region29: #{tpu_custom_call.1} parent=5 // pred_check
        _
      $region30: #{tpu_custom_call.1} parent=5 // pred_check_branch
        %179 = sbr.rel (%p176) target = $region32
      $region31: #{tpu_custom_call.1} parent=5 // pred_region
        %s180 = ssub.s32 %s16, 1
        %s181 = sand.u32 %s29, 1
        %s182 = scalar_lea.sflag [#allocation3], %s181
        %s183 = sand.u32 %s29, 1
        %s184 = smul.addr %s183, 512
        %s185 = scalar_lea.vmem [#allocation2], %s184
        // Predicated region
        $region33: #{tpu_custom_call.1} parent=31 // pred_check
          %p186 = pneg %p42
        $region34: #{tpu_custom_call.1} parent=31 // pred_check_branch
          %188 = sbr.rel (%p186) target = $region36
        $region35: #{tpu_custom_call.1} parent=31 // pred_region
          %189 = dma.done %s182, 8192
        $region36: #{tpu_custom_call.1} parent=31 // pred_fallthru
          _
        // Predicated region
        $region37: #{tpu_custom_call.1} parent=31 // pred_check
          %p190 = pneg %p63
        $region38: #{tpu_custom_call.1} parent=31 // pred_check_branch
          %192 = sbr.rel (%p190) target = $region40
        $region39: #{tpu_custom_call.1} parent=31 // pred_region
          %193 = dma.done [#allocation6], 4096
        $region40: #{tpu_custom_call.1} parent=31 // pred_fallthru
          _
        %s194 = sand.u32 %s29, 1
        %s195 = scalar_lea.sflag [#allocation3], %s194
        %s196 = sand.u32 %s29, 1
        %s197 = smul.addr %s196, 512
        %s198 = scalar_lea.vmem [#allocation2], %s197
        %p199 = pneg %p42
        %p200 = pneg %p39
        %p201 = pneg %p63
        %p202 = pneg %p60
        %p203 = pneg %p84
        %p204 = pneg %p81
        %p205 = pneg %p110
        %p206 = pneg %p107
        %s207 = sand.u32 %s97, 1
        %s208 = scalar_lea.sflag [#allocation4], %s207
        %s209 = sand.u32 %s97, 1
        %s210 = smul.addr %s209, 512
        %s211 = scalar_lea.vmem [#allocation7], %s210
        %s212 = smul.u32 32, %s21
        %s213 = ssub.s32 48, %s212
        %p214 = scmp.lt.s32.totalorder %s213, 32
        %s215 = scalar_select %p214, %s213, 32
        %s216 = smul.u32 128, %s215
        %s217 = smul.u32 %s216, 2
        %s218 = smul.u32 32, %s21
        %s219 = ssub.s32 48, %s218
        %p220 = scmp.lt.s32.totalorder %s219, 32
        %s221 = scalar_select %p220, %s219, 32
        %s222 = smul.u32 128, %s221
        %s223 = smul.u32 %s222, 2
        %v224 = vld [vmem:[%s185] sm:$0xff]
        %v225 = vld [vmem:[%s185 + $0x8] sm:$0xff]
        %v226 = vld [vmem:[%s185 + $0x10] sm:$0xff]
        %v227 = vld [vmem:[%s185 + $0x18] sm:$0xff]
        %v228 = vld [vmem:[%s185 + $0x20] sm:$0xff]
        %v229 = vld [vmem:[%s185 + $0x28] sm:$0xff]
        %v230 = vld [vmem:[%s185 + $0x30] sm:$0xff]
        %v231 = vld [vmem:[%s185 + $0x38] sm:$0xff]
        %v232 = vld [vmem:[%s185 + $0x40] sm:$0xff]
        %v233 = vld [vmem:[%s185 + $0x48] sm:$0xff]
        %v234 = vld [vmem:[%s185 + $0x50] sm:$0xff]
        %v235 = vld [vmem:[%s185 + $0x58] sm:$0xff]
        %v236 = vld [vmem:[%s185 + $0x60] sm:$0xff]
        %v237 = vld [vmem:[%s185 + $0x68] sm:$0xff]
        %v238 = vld [vmem:[%s185 + $0x70] sm:$0xff]
        %v239 = vld [vmem:[%s185 + $0x78] sm:$0xff]
        %v240 = vld [vmem:[%s185 + $0x80] sm:$0xff]
        %v241 = vld [vmem:[%s185 + $0x88] sm:$0xff]
        %v242 = vld [vmem:[%s185 + $0x90] sm:$0xff]
        %v243 = vld [vmem:[%s185 + $0x98] sm:$0xff]
        %v244 = vld [vmem:[%s185 + $0xa0] sm:$0xff]
        %v245 = vld [vmem:[%s185 + $0xa8] sm:$0xff]
        %v246 = vld [vmem:[%s185 + $0xb0] sm:$0xff]
        %v247 = vld [vmem:[%s185 + $0xb8] sm:$0xff]
        %v248 = vld [vmem:[%s185 + $0xc0] sm:$0xff]
        %v249 = vld [vmem:[%s185 + $0xc8] sm:$0xff]
        %v250 = vld [vmem:[%s185 + $0xd0] sm:$0xff]
        %v251 = vld [vmem:[%s185 + $0xd8] sm:$0xff]
        %v252 = vld [vmem:[%s185 + $0xe0] sm:$0xff]
        %v253 = vld [vmem:[%s185 + $0xe8] sm:$0xff]
        %v254 = vld [vmem:[%s185 + $0xf0] sm:$0xff]
        %v255 = vld [vmem:[%s185 + $0xf8] sm:$0xff]
        %v256 = vld [vmem:[%s185 + $0x100] sm:$0xff]
        %v257 = vld [vmem:[%s185 + $0x108] sm:$0xff]
        %v258 = vld [vmem:[%s185 + $0x110] sm:$0xff]
        %v259 = vld [vmem:[%s185 + $0x118] sm:$0xff]
        %v260 = vld [vmem:[%s185 + $0x120] sm:$0xff]
        %v261 = vld [vmem:[%s185 + $0x128] sm:$0xff]
        %v262 = vld [vmem:[%s185 + $0x130] sm:$0xff]
        %v263 = vld [vmem:[%s185 + $0x138] sm:$0xff]
        %v264 = vld [vmem:[%s185 + $0x140] sm:$0xff]
        %v265 = vld [vmem:[%s185 + $0x148] sm:$0xff]
        %v266 = vld [vmem:[%s185 + $0x150] sm:$0xff]
        %v267 = vld [vmem:[%s185 + $0x158] sm:$0xff]
        %v268 = vld [vmem:[%s185 + $0x160] sm:$0xff]
        %v269 = vld [vmem:[%s185 + $0x168] sm:$0xff]
        %v270 = vld [vmem:[%s185 + $0x170] sm:$0xff]
        %v271 = vld [vmem:[%s185 + $0x178] sm:$0xff]
        %v272 = vld [vmem:[%s185 + $0x180] sm:$0xff]
        %v273 = vld [vmem:[%s185 + $0x188] sm:$0xff]
        %v274 = vld [vmem:[%s185 + $0x190] sm:$0xff]
        %v275 = vld [vmem:[%s185 + $0x198] sm:$0xff]
        %v276 = vld [vmem:[%s185 + $0x1a0] sm:$0xff]
        %v277 = vld [vmem:[%s185 + $0x1a8] sm:$0xff]
        %v278 = vld [vmem:[%s185 + $0x1b0] sm:$0xff]
        %v279 = vld [vmem:[%s185 + $0x1b8] sm:$0xff]
        %v280 = vld [vmem:[%s185 + $0x1c0] sm:$0xff]
        %v281 = vld [vmem:[%s185 + $0x1c8] sm:$0xff]
        %v282 = vld [vmem:[%s185 + $0x1d0] sm:$0xff]
        %v283 = vld [vmem:[%s185 + $0x1d8] sm:$0xff]
        %v284 = vld [vmem:[%s185 + $0x1e0] sm:$0xff]
        %v285 = vld [vmem:[%s185 + $0x1e8] sm:$0xff]
        %v286 = vld [vmem:[%s185 + $0x1f0] sm:$0xff]
        %v287 = vld [vmem:[%s185 + $0x1f8] sm:$0xff]
        %v288 = vpack.c.bf16 %v226, %v224
        %v289 = vpack.c.bf16 %v227, %v225
        %v290 = vpack.c.bf16 %v230, %v228
        %v291 = vpack.c.bf16 %v231, %v229
        %v292 = vpack.c.bf16 %v234, %v232
        %v293 = vpack.c.bf16 %v235, %v233
        %v294 = vpack.c.bf16 %v238, %v236
        %v295 = vpack.c.bf16 %v239, %v237
        %v296 = vpack.c.bf16 %v242, %v240
        %v297 = vpack.c.bf16 %v243, %v241
        %v298 = vpack.c.bf16 %v246, %v244
        %v299 = vpack.c.bf16 %v247, %v245
        %v300 = vpack.c.bf16 %v250, %v248
        %v301 = vpack.c.bf16 %v251, %v249
        %v302 = vpack.c.bf16 %v254, %v252
        %v303 = vpack.c.bf16 %v255, %v253
        %v304 = vpack.c.bf16 %v258, %v256
        %v305 = vpack.c.bf16 %v259, %v257
        %v306 = vpack.c.bf16 %v262, %v260
        %v307 = vpack.c.bf16 %v263, %v261
        %v308 = vpack.c.bf16 %v266, %v264
        %v309 = vpack.c.bf16 %v267, %v265
        %v310 = vpack.c.bf16 %v270, %v268
        %v311 = vpack.c.bf16 %v271, %v269
        %v312 = vpack.c.bf16 %v274, %v272
        %v313 = vpack.c.bf16 %v275, %v273
        %v314 = vpack.c.bf16 %v278, %v276
        %v315 = vpack.c.bf16 %v279, %v277
        %v316 = vpack.c.bf16 %v282, %v280
        %v317 = vpack.c.bf16 %v283, %v281
        %v318 = vpack.c.bf16 %v286, %v284
        %v319 = vpack.c.bf16 %v287, %v285
        %v320 = vld [vmem:[#allocation5] sm:$0xff]
        %v321 = vld [vmem:[#allocation5 + $0x8] sm:$0xff]
        %v322 = vld [vmem:[#allocation5 + $0x10] sm:$0xff]
        %v323 = vld [vmem:[#allocation5 + $0x18] sm:$0xff]
        %v324 = vld [vmem:[#allocation5 + $0x20] sm:$0xff]
        %v325 = vld [vmem:[#allocation5 + $0x28] sm:$0xff]
        %v326 = vld [vmem:[#allocation5 + $0x30] sm:$0xff]
        %v327 = vld [vmem:[#allocation5 + $0x38] sm:$0xff]
        %v328 = vld [vmem:[#allocation5 + $0x40] sm:$0xff]
        %v329 = vld [vmem:[#allocation5 + $0x48] sm:$0xff]
        %v330 = vld [vmem:[#allocation5 + $0x50] sm:$0xff]
        %v331 = vld [vmem:[#allocation5 + $0x58] sm:$0xff]
        %v332 = vld [vmem:[#allocation5 + $0x60] sm:$0xff]
        %v333 = vld [vmem:[#allocation5 + $0x68] sm:$0xff]
        %v334 = vld [vmem:[#allocation5 + $0x70] sm:$0xff]
        %v335 = vld [vmem:[#allocation5 + $0x78] sm:$0xff]
        %v336 = vld [vmem:[#allocation5 + $0x80] sm:$0xff]
        %v337 = vld [vmem:[#allocation5 + $0x88] sm:$0xff]
        %v338 = vld [vmem:[#allocation5 + $0x90] sm:$0xff]
        %v339 = vld [vmem:[#allocation5 + $0x98] sm:$0xff]
        %v340 = vld [vmem:[#allocation5 + $0xa0] sm:$0xff]
        %v341 = vld [vmem:[#allocation5 + $0xa8] sm:$0xff]
        %v342 = vld [vmem:[#allocation5 + $0xb0] sm:$0xff]
        %v343 = vld [vmem:[#allocation5 + $0xb8] sm:$0xff]
        %v344 = vld [vmem:[#allocation5 + $0xc0] sm:$0xff]
        %v345 = vld [vmem:[#allocation5 + $0xc8] sm:$0xff]
        %v346 = vld [vmem:[#allocation5 + $0xd0] sm:$0xff]
        %v347 = vld [vmem:[#allocation5 + $0xd8] sm:$0xff]
        %v348 = vld [vmem:[#allocation5 + $0xe0] sm:$0xff]
        %v349 = vld [vmem:[#allocation5 + $0xe8] sm:$0xff]
        %v350 = vld [vmem:[#allocation5 + $0xf0] sm:$0xff]
        %v351 = vld [vmem:[#allocation5 + $0xf8] sm:$0xff]
        %v352 = vld [vmem:[%s2] sm:$0x3]
        %v354 = vlaneseq
        %v355 = vshrl.u32 %v354, 7
        %v356 = vsub.s32 0, %v355
        %v357 = vrot.slane %v352, %v356
        %v358 = vlaneseq
        %v359 = vshrl.u32 %v358, 7
        %v360 = vsub.s32 1, %v359
        %v361 = vrot.slane %v352, %v360
        %v396 = vunpack.c.l.b16 %v320
        %v397 = vunpack.c.h.b16 %v320
        %v398 = vunpack.c.l.b16 %v321
        %v399 = vunpack.c.h.b16 %v321
        %v400 = vunpack.c.l.b16 %v322
        %v401 = vunpack.c.h.b16 %v322
        %v402 = vunpack.c.l.b16 %v323
        %v403 = vunpack.c.h.b16 %v323
        %v404 = vunpack.c.l.b16 %v324
        %v405 = vunpack.c.h.b16 %v324
        %v406 = vunpack.c.l.b16 %v325
        %v407 = vunpack.c.h.b16 %v325
        %v408 = vunpack.c.l.b16 %v326
        %v409 = vunpack.c.h.b16 %v326
        %v410 = vunpack.c.l.b16 %v327
        %v411 = vunpack.c.h.b16 %v327
        %v412 = vunpack.c.l.b16 %v328
        %v413 = vunpack.c.h.b16 %v328
        %v414 = vunpack.c.l.b16 %v329
        %v415 = vunpack.c.h.b16 %v329
        %v416 = vunpack.c.l.b16 %v330
        %v417 = vunpack.c.h.b16 %v330
        %v418 = vunpack.c.l.b16 %v331
        %v419 = vunpack.c.h.b16 %v331
        %v420 = vunpack.c.l.b16 %v332
        %v421 = vunpack.c.h.b16 %v332
        %v422 = vunpack.c.l.b16 %v333
        %v423 = vunpack.c.h.b16 %v333
        %v424 = vunpack.c.l.b16 %v334
        %v425 = vunpack.c.h.b16 %v334
        %v426 = vunpack.c.l.b16 %v335
        %v427 = vunpack.c.h.b16 %v335
        %v428 = vunpack.c.l.b16 %v336
        %v429 = vunpack.c.h.b16 %v336
        %v430 = vunpack.c.l.b16 %v337
        %v431 = vunpack.c.h.b16 %v337
        %v432 = vunpack.c.l.b16 %v338
        %v433 = vunpack.c.h.b16 %v338
        %v434 = vunpack.c.l.b16 %v339
        %v435 = vunpack.c.h.b16 %v339
        %v436 = vunpack.c.l.b16 %v340
        %v437 = vunpack.c.h.b16 %v340
        %v438 = vunpack.c.l.b16 %v341
        %v439 = vunpack.c.h.b16 %v341
        %v440 = vunpack.c.l.b16 %v342
        %v441 = vunpack.c.h.b16 %v342
        %v442 = vunpack.c.l.b16 %v343
        %v443 = vunpack.c.h.b16 %v343
        %v444 = vunpack.c.l.b16 %v344
        %v445 = vunpack.c.h.b16 %v344
        %v446 = vunpack.c.l.b16 %v345
        %v447 = vunpack.c.h.b16 %v345
        %v448 = vunpack.c.l.b16 %v346
        %v449 = vunpack.c.h.b16 %v346
        %v450 = vunpack.c.l.b16 %v347
        %v451 = vunpack.c.h.b16 %v347
        %v452 = vunpack.c.l.b16 %v348
        %v453 = vunpack.c.h.b16 %v348
        %v454 = vunpack.c.l.b16 %v349
        %v455 = vunpack.c.h.b16 %v349
        %v456 = vunpack.c.l.b16 %v350
        %v457 = vunpack.c.h.b16 %v350
        %v458 = vunpack.c.l.b16 %v351
        %v459 = vunpack.c.h.b16 %v351
        %v460 = vpack.c.b16 %v398, %v396
        %v461 = vpack.c.b16 %v399, %v397
        %v462 = vpack.c.b16 %v402, %v400
        %v463 = vpack.c.b16 %v403, %v401
        %v464 = vpack.c.b16 %v406, %v404
        %v465 = vpack.c.b16 %v407, %v405
        %v466 = vpack.c.b16 %v410, %v408
        %v467 = vpack.c.b16 %v411, %v409
        %v468 = vpack.c.b16 %v414, %v412
        %v469 = vpack.c.b16 %v415, %v413
        %v470 = vpack.c.b16 %v418, %v416
        %v471 = vpack.c.b16 %v419, %v417
        %v472 = vpack.c.b16 %v422, %v420
        %v473 = vpack.c.b16 %v423, %v421
        %v474 = vpack.c.b16 %v426, %v424
        %v475 = vpack.c.b16 %v427, %v425
        %v476 = vpack.c.b16 %v430, %v428
        %v477 = vpack.c.b16 %v431, %v429
        %v478 = vpack.c.b16 %v434, %v432
        %v479 = vpack.c.b16 %v435, %v433
        %v480 = vpack.c.b16 %v438, %v436
        %v481 = vpack.c.b16 %v439, %v437
        %v482 = vpack.c.b16 %v442, %v440
        %v483 = vpack.c.b16 %v443, %v441
        %v484 = vpack.c.b16 %v446, %v444
        %v485 = vpack.c.b16 %v447, %v445
        %v486 = vpack.c.b16 %v450, %v448
        %v487 = vpack.c.b16 %v451, %v449
        %v488 = vpack.c.b16 %v454, %v452
        %v489 = vpack.c.b16 %v455, %v453
        %v490 = vpack.c.b16 %v458, %v456
        %v491 = vpack.c.b16 %v459, %v457
        %524 = vmatprep.subr.bf16.mxu0 %v461
        %525 = vmatpush1.bf16.msra.mxu0 %v460
        %526 = vmatprep.subr.bf16.mxu0 %v463
        %527 = vmatpush1.bf16.msra.mxu0 %v462
        %528 = vmatprep.subr.bf16.mxu0 %v465
        %529 = vmatpush1.bf16.msra.mxu0 %v464
        %530 = vmatprep.subr.bf16.mxu0 %v467
        %531 = vmatpush1.bf16.msra.mxu0 %v466
        %532 = vmatprep.subr.bf16.mxu0 %v469
        %533 = vmatpush1.bf16.msra.mxu0 %v468
        %534 = vmatprep.subr.bf16.mxu0 %v471
        %535 = vmatpush1.bf16.msra.mxu0 %v470
        %536 = vmatprep.subr.bf16.mxu0 %v473
        %537 = vmatpush1.bf16.msra.mxu0 %v472
        %538 = vmatprep.subr.bf16.mxu0 %v475
        %539 = vmatpush1.bf16.msra.mxu0 %v474
        %540 = vmatprep.subr.bf16.mxu0 %v477
        %541 = vmatpush1.bf16.msra.mxu0 %v476
        %542 = vmatprep.subr.bf16.mxu0 %v479
        %543 = vmatpush1.bf16.msra.mxu0 %v478
        %544 = vmatprep.subr.bf16.mxu0 %v481
        %545 = vmatpush1.bf16.msra.mxu0 %v480
        %546 = vmatprep.subr.bf16.mxu0 %v483
        %547 = vmatpush1.bf16.msra.mxu0 %v482
        %548 = vmatprep.subr.bf16.mxu0 %v485
        %549 = vmatpush1.bf16.msra.mxu0 %v484
        %550 = vmatprep.subr.bf16.mxu0 %v487
        %551 = vmatpush1.bf16.msra.mxu0 %v486
        %552 = vmatprep.subr.bf16.mxu0 %v489
        %553 = vmatpush1.bf16.msra.mxu0 %v488
        %554 = vmatprep.subr.bf16.mxu0 %v491
        %555 = vmatpush1.bf16.msra.mxu0 %v490
        %556 = vmatprep.mubr.bf16.mxu0 %v289
        %557 = vmatmul.mubr.bf16.gmra.mrb[0].mxu0 %v288
        %v558 = vpop.f32.mrb[0].mxu0
        %v559 = vadd.f32 %v357, %v558
        %v560 = vpop.f32.mrb[0].mxu0
        %v561 = vadd.f32 %v361, %v560
        %v562 = vpop.f32.mrb[0].mxu0
        %v563 = vadd.f32 %v357, %v562
        %v564 = vpop.f32.mrb[0].mxu0
        %v565 = vadd.f32 %v361, %v564
        %566 = vmatprep.mubr.bf16.mxu0 %v291
        %567 = vmatmul.mubr.bf16.gmra.mrb[0].mxu0 %v290
        %v568 = vpop.f32.mrb[0].mxu0
        %v569 = vadd.f32 %v357, %v568
        %v570 = vpop.f32.mrb[0].mxu0
        %v571 = vadd.f32 %v361, %v570
        %v572 = vpop.f32.mrb[0].mxu0
        %v573 = vadd.f32 %v357, %v572
        %v574 = vpop.f32.mrb[0].mxu0
        %v575 = vadd.f32 %v361, %v574
        %576 = vmatprep.mubr.bf16.mxu0 %v293
        %577 = vmatmul.mubr.bf16.gmra.mrb[0].mxu0 %v292
        %v578 = vpop.f32.mrb[0].mxu0
        %v579 = vadd.f32 %v357, %v578
        %v580 = vpop.f32.mrb[0].mxu0
        %v581 = vadd.f32 %v361, %v580
        %v582 = vpop.f32.mrb[0].mxu0
        %v583 = vadd.f32 %v357, %v582
        %v584 = vpop.f32.mrb[0].mxu0
        %v585 = vadd.f32 %v361, %v584
        %586 = vmatprep.mubr.bf16.mxu0 %v295
        %587 = vmatmul.mubr.bf16.gmra.mrb[0].mxu0 %v294
        %v588 = vpop.f32.mrb[0].mxu0
        %v589 = vadd.f32 %v357, %v588
        %v590 = vpop.f32.mrb[0].mxu0
        %v591 = vadd.f32 %v361, %v590
        %v592 = vpop.f32.mrb[0].mxu0
        %v593 = vadd.f32 %v357, %v592
        %v594 = vpop.f32.mrb[0].mxu0
        %v595 = vadd.f32 %v361, %v594
        %596 = vmatprep.mubr.bf16.mxu0 %v297
        %597 = vmatmul.mubr.bf16.gmra.mrb[0].mxu0 %v296
        %v598 = vpop.f32.mrb[0].mxu0
        %v599 = vadd.f32 %v357, %v598
        %v600 = vpop.f32.mrb[0].mxu0
        %v601 = vadd.f32 %v361, %v600
        %v602 = vpop.f32.mrb[0].mxu0
        %v603 = vadd.f32 %v357, %v602
        %v604 = vpop.f32.mrb[0].mxu0
        %v605 = vadd.f32 %v361, %v604
        %606 = vmatprep.mubr.bf16.mxu0 %v299
        %607 = vmatmul.mubr.bf16.gmra.mrb[0].mxu0 %v298
        %v608 = vpop.f32.mrb[0].mxu0
        %v609 = vadd.f32 %v357, %v608
        %v610 = vpop.f32.mrb[0].mxu0
        %v611 = vadd.f32 %v361, %v610
        %v612 = vpop.f32.mrb[0].mxu0
        %v613 = vadd.f32 %v357, %v612
        %v614 = vpop.f32.mrb[0].mxu0
        %v615 = vadd.f32 %v361, %v614
        %616 = vmatprep.mubr.bf16.mxu0 %v301
        %617 = vmatmul.mubr.bf16.gmra.mrb[0].mxu0 %v300
        %v618 = vpop.f32.mrb[0].mxu0
        %v619 = vadd.f32 %v357, %v618
        %v620 = vpop.f32.mrb[0].mxu0
        %v621 = vadd.f32 %v361, %v620
        %v622 = vpop.f32.mrb[0].mxu0
        %v623 = vadd.f32 %v357, %v622
        %v624 = vpop.f32.mrb[0].mxu0
        %v625 = vadd.f32 %v361, %v624
        %626 = vmatprep.mubr.bf16.mxu0 %v303
        %627 = vmatmul.mubr.bf16.gmra.mrb[0].mxu0 %v302
        %v628 = vpop.f32.mrb[0].mxu0
        %v629 = vadd.f32 %v357, %v628
        %v630 = vpop.f32.mrb[0].mxu0
        %v631 = vadd.f32 %v361, %v630
        %v632 = vpop.f32.mrb[0].mxu0
        %v633 = vadd.f32 %v357, %v632
        %v634 = vpop.f32.mrb[0].mxu0
        %v635 = vadd.f32 %v361, %v634
        %636 = vmatprep.mubr.bf16.mxu0 %v305
        %637 = vmatmul.mubr.bf16.gmra.mrb[0].mxu0 %v304
        %v638 = vpop.f32.mrb[0].mxu0
        %v639 = vadd.f32 %v357, %v638
        %v640 = vpop.f32.mrb[0].mxu0
        %v641 = vadd.f32 %v361, %v640
        %v642 = vpop.f32.mrb[0].mxu0
        %v643 = vadd.f32 %v357, %v642
        %v644 = vpop.f32.mrb[0].mxu0
        %v645 = vadd.f32 %v361, %v644
        %646 = vmatprep.mubr.bf16.mxu0 %v307
        %647 = vmatmul.mubr.bf16.gmra.mrb[0].mxu0 %v306
        %v648 = vpop.f32.mrb[0].mxu0
        %v649 = vadd.f32 %v357, %v648
        %v650 = vpop.f32.mrb[0].mxu0
        %v651 = vadd.f32 %v361, %v650
        %v652 = vpop.f32.mrb[0].mxu0
        %v653 = vadd.f32 %v357, %v652
        %v654 = vpop.f32.mrb[0].mxu0
        %v655 = vadd.f32 %v361, %v654
        %656 = vmatprep.mubr.bf16.mxu0 %v309
        %657 = vmatmul.mubr.bf16.gmra.mrb[0].mxu0 %v308
        %v658 = vpop.f32.mrb[0].mxu0
        %v659 = vadd.f32 %v357, %v658
        %v660 = vpop.f32.mrb[0].mxu0
        %v661 = vadd.f32 %v361, %v660
        %v662 = vpop.f32.mrb[0].mxu0
        %v663 = vadd.f32 %v357, %v662
        %v664 = vpop.f32.mrb[0].mxu0
        %v665 = vadd.f32 %v361, %v664
        %666 = vmatprep.mubr.bf16.mxu0 %v311
        %667 = vmatmul.mubr.bf16.gmra.mrb[0].mxu0 %v310
        %v668 = vpop.f32.mrb[0].mxu0
        %v669 = vadd.f32 %v357, %v668
        %v670 = vpop.f32.mrb[0].mxu0
        %v671 = vadd.f32 %v361, %v670
        %v672 = vpop.f32.mrb[0].mxu0
        %v673 = vadd.f32 %v357, %v672
        %v674 = vpop.f32.mrb[0].mxu0
        %v675 = vadd.f32 %v361, %v674
        %676 = vmatprep.mubr.bf16.mxu0 %v313
        %677 = vmatmul.mubr.bf16.gmra.mrb[0].mxu0 %v312
        %v678 = vpop.f32.mrb[0].mxu0
        %v679 = vadd.f32 %v357, %v678
        %v680 = vpop.f32.mrb[0].mxu0
        %v681 = vadd.f32 %v361, %v680
        %v682 = vpop.f32.mrb[0].mxu0
        %v683 = vadd.f32 %v357, %v682
        %v684 = vpop.f32.mrb[0].mxu0
        %v685 = vadd.f32 %v361, %v684
        %686 = vmatprep.mubr.bf16.mxu0 %v315
        %687 = vmatmul.mubr.bf16.gmra.mrb[0].mxu0 %v314
        %v688 = vpop.f32.mrb[0].mxu0
        %v689 = vadd.f32 %v357, %v688
        %v690 = vpop.f32.mrb[0].mxu0
        %v691 = vadd.f32 %v361, %v690
        %v692 = vpop.f32.mrb[0].mxu0
        %v693 = vadd.f32 %v357, %v692
        %v694 = vpop.f32.mrb[0].mxu0
        %v695 = vadd.f32 %v361, %v694
        %696 = vmatprep.mubr.bf16.mxu0 %v317
        %697 = vmatmul.mubr.bf16.gmra.mrb[0].mxu0 %v316
        %v698 = vpop.f32.mrb[0].mxu0
        %v699 = vadd.f32 %v357, %v698
        %v700 = vpop.f32.mrb[0].mxu0
        %v701 = vadd.f32 %v361, %v700
        %v702 = vpop.f32.mrb[0].mxu0
        %v703 = vadd.f32 %v357, %v702
        %v704 = vpop.f32.mrb[0].mxu0
        %v705 = vadd.f32 %v361, %v704
        %706 = vmatprep.mubr.bf16.mxu0 %v319
        %707 = vmatmul.mubr.bf16.gmra.mrb[0].mxu0 %v318
        %v708 = vpop.f32.mrb[0].mxu0
        %v709 = vadd.f32 %v357, %v708
        %v710 = vpop.f32.mrb[0].mxu0
        %v711 = vadd.f32 %v361, %v710
        %v712 = vpop.f32.mrb[0].mxu0
        %v713 = vadd.f32 %v357, %v712
        %v714 = vpop.f32.mrb[0].mxu0
        %v715 = vadd.f32 %v361, %v714
        %716 = vdwg.mxu0
        %717 = vst [vmem:[%s211] sm:$0xff] %v559
        %718 = vst [vmem:[%s211 + $0x8] sm:$0xff] %v561
        %719 = vst [vmem:[%s211 + $0x10] sm:$0xff] %v563
        %720 = vst [vmem:[%s211 + $0x18] sm:$0xff] %v565
        %721 = vst [vmem:[%s211 + $0x20] sm:$0xff] %v569
        %722 = vst [vmem:[%s211 + $0x28] sm:$0xff] %v571
        %723 = vst [vmem:[%s211 + $0x30] sm:$0xff] %v573
        %724 = vst [vmem:[%s211 + $0x38] sm:$0xff] %v575
        %725 = vst [vmem:[%s211 + $0x40] sm:$0xff] %v579
        %726 = vst [vmem:[%s211 + $0x48] sm:$0xff] %v581
        %727 = vst [vmem:[%s211 + $0x50] sm:$0xff] %v583
        %728 = vst [vmem:[%s211 + $0x58] sm:$0xff] %v585
        %729 = vst [vmem:[%s211 + $0x60] sm:$0xff] %v589
        %730 = vst [vmem:[%s211 + $0x68] sm:$0xff] %v591
        %731 = vst [vmem:[%s211 + $0x70] sm:$0xff] %v593
        %732 = vst [vmem:[%s211 + $0x78] sm:$0xff] %v595
        %733 = vst [vmem:[%s211 + $0x80] sm:$0xff] %v599
        %734 = vst [vmem:[%s211 + $0x88] sm:$0xff] %v601
        %735 = vst [vmem:[%s211 + $0x90] sm:$0xff] %v603
        %736 = vst [vmem:[%s211 + $0x98] sm:$0xff] %v605
        %737 = vst [vmem:[%s211 + $0xa0] sm:$0xff] %v609
        %738 = vst [vmem:[%s211 + $0xa8] sm:$0xff] %v611
        %739 = vst [vmem:[%s211 + $0xb0] sm:$0xff] %v613
        %740 = vst [vmem:[%s211 + $0xb8] sm:$0xff] %v615
        %741 = vst [vmem:[%s211 + $0xc0] sm:$0xff] %v619
        %742 = vst [vmem:[%s211 + $0xc8] sm:$0xff] %v621
        %743 = vst [vmem:[%s211 + $0xd0] sm:$0xff] %v623
        %744 = vst [vmem:[%s211 + $0xd8] sm:$0xff] %v625
        %745 = vst [vmem:[%s211 + $0xe0] sm:$0xff] %v629
        %746 = vst [vmem:[%s211 + $0xe8] sm:$0xff] %v631
        %747 = vst [vmem:[%s211 + $0xf0] sm:$0xff] %v633
        %748 = vst [vmem:[%s211 + $0xf8] sm:$0xff] %v635
        %749 = vst [vmem:[%s211 + $0x100] sm:$0xff] %v639
        %750 = vst [vmem:[%s211 + $0x108] sm:$0xff] %v641
        %751 = vst [vmem:[%s211 + $0x110] sm:$0xff] %v643
        %752 = vst [vmem:[%s211 + $0x118] sm:$0xff] %v645
        %753 = vst [vmem:[%s211 + $0x120] sm:$0xff] %v649
        %754 = vst [vmem:[%s211 + $0x128] sm:$0xff] %v651
        %755 = vst [vmem:[%s211 + $0x130] sm:$0xff] %v653
        %756 = vst [vmem:[%s211 + $0x138] sm:$0xff] %v655
        %757 = vst [vmem:[%s211 + $0x140] sm:$0xff] %v659
        %758 = vst [vmem:[%s211 + $0x148] sm:$0xff] %v661
        %759 = vst [vmem:[%s211 + $0x150] sm:$0xff] %v663
        %760 = vst [vmem:[%s211 + $0x158] sm:$0xff] %v665
        %761 = vst [vmem:[%s211 + $0x160] sm:$0xff] %v669
        %762 = vst [vmem:[%s211 + $0x168] sm:$0xff] %v671
        %763 = vst [vmem:[%s211 + $0x170] sm:$0xff] %v673
        %764 = vst [vmem:[%s211 + $0x178] sm:$0xff] %v675
        %765 = vst [vmem:[%s211 + $0x180] sm:$0xff] %v679
        %766 = vst [vmem:[%s211 + $0x188] sm:$0xff] %v681
        %767 = vst [vmem:[%s211 + $0x190] sm:$0xff] %v683
        %768 = vst [vmem:[%s211 + $0x198] sm:$0xff] %v685
        %769 = vst [vmem:[%s211 + $0x1a0] sm:$0xff] %v689
        %770 = vst [vmem:[%s211 + $0x1a8] sm:$0xff] %v691
        %771 = vst [vmem:[%s211 + $0x1b0] sm:$0xff] %v693
        %772 = vst [vmem:[%s211 + $0x1b8] sm:$0xff] %v695
        %773 = vst [vmem:[%s211 + $0x1c0] sm:$0xff] %v699
        %774 = vst [vmem:[%s211 + $0x1c8] sm:$0xff] %v701
        %775 = vst [vmem:[%s211 + $0x1d0] sm:$0xff] %v703
        %776 = vst [vmem:[%s211 + $0x1d8] sm:$0xff] %v705
        %777 = vst [vmem:[%s211 + $0x1e0] sm:$0xff] %v709
        %778 = vst [vmem:[%s211 + $0x1e8] sm:$0xff] %v711
        %779 = vst [vmem:[%s211 + $0x1f0] sm:$0xff] %v713
        %780 = vst [vmem:[%s211 + $0x1f8] sm:$0xff] %v715
        %s781 = sand.u32 %s97, 1
        %s782 = scalar_lea.sflag [#allocation4], %s781
        %s783 = sand.u32 %s97, 1
        %s784 = smul.addr %s783, 512
        %s785 = scalar_lea.vmem [#allocation7], %s784
        // Predicated region
        $region41: #{tpu_custom_call.1} parent=31 // pred_check
          %p786 = pneg %p107
        $region42: #{tpu_custom_call.1} parent=31 // pred_check_branch
          %788 = sbr.rel (%p786) target = $region44
        $region43: #{tpu_custom_call.1} parent=31 // pred_region
          %s789 = smul.u32 32, %s21
          %s790 = ssub.s32 48, %s789
          %p791 = scmp.lt.s32.totalorder %s790, 32
          %s792 = scalar_select %p791, %s790, 32
          %s793 = smul.u32 128, %s792
          %s794 = smul.u32 %s793, 2
          %s796 = ssub.s32 8192, %s794
          %797 = vsyncadd %s782, %s796
          %p798 = scmp.ne.s32.totalorder 0, %s794
          %s799 = smul.addr %s789, 2
          %s800 = smul.addr %s799, 128
          %s801 = scalar_lea.hbm %s3, %s800
          %s802 = smul.u32 16, %s792
          %s803 = sshll.u32 %s785, 4
          %s804 = int_to_ptr.vmem [resolvable:$true] %s803
          %s805 = sshll.u32 %s802, 4
          %809 = dma.vmem_to_hbm [thread:$0]  (%p798), %s804, %s805, %s801, %s782, 256, 256, 16
        $region44: #{tpu_custom_call.1} parent=31 // pred_fallthru
          _
      $region32: #{tpu_custom_call.1} parent=5 // pred_fallthru
        _
      %p810 = scmp.le.s32.totalorder 2, %s16
      // Predicated region
      $region45: #{tpu_custom_call.1} parent=5 // pred_check
        %p811 = pneg %p810
      $region46: #{tpu_custom_call.1} parent=5 // pred_check_branch
        %813 = sbr.rel (%p811) target = $region48
      $region47: #{tpu_custom_call.1} parent=5 // pred_region
        %s814 = ssub.s32 %s16, 2
        // Predicated region
        $region49: #{tpu_custom_call.1} parent=47 // pred_check
          %p815 = pneg %p113
        $region50: #{tpu_custom_call.1} parent=47 // pred_check_branch
          %817 = sbr.rel (%p815) target = $region52
        $region51: #{tpu_custom_call.1} parent=47 // pred_region
          %s818 = sand.u32 %s98, 1
          %s819 = scalar_lea.sflag [#allocation4], %s818
          %s820 = sand.u32 %s98, 1
          %s821 = smul.addr %s820, 512
          %s822 = scalar_lea.vmem [#allocation7], %s821
          %823 = dma.done %s819, 8192
        $region52: #{tpu_custom_call.1} parent=47 // pred_fallthru
          _
      $region48: #{tpu_custom_call.1} parent=5 // pred_fallthru
        _
    $region6: #{tpu_custom_call.1} parent=1 // loop_footer
      %s20 = sadd.s32 1, %s16
    $region7: #{tpu_custom_call.1} parent=1 // loop_footer_branch
      %15 = sbr.rel target = $region3
    $region8: #{tpu_custom_call.1} parent=1 // loop_exit
      _
    %824 = vsyncpa [#allocation3], 1
    %s825 = scalar_lea.sflag [#allocation3], 1
    %826 = vsyncpa %s825, 1
    %827 = vsyncpa [#allocation6], 1
    %828 = vsyncpa [#allocation4], 1
    %s829 = scalar_lea.sflag [#allocation4], 1
    %830 = vsyncpa %s829, 1

</llo_original>
